<compile_context>
chip_gen: v7x
topology: tpu7x:2x2x1
jax: 0.10.0
libtpu: 0.0.40
codegen_flags: <defaults>
</compile_context>

<pallas_src>
import functools

import jax
import jax.numpy as jnp
from jax import lax
from jax.experimental import pallas as pl
from jax.experimental.pallas import tpu as pltpu


_MAX_TILE = 512                      # rows per tile (logits block 512x128xf32 = 256 KiB)
_VMEM_LIMIT = 32 * 1024 * 1024       # explicit scoped-VMEM budget (valid on all gens)


def _round_up(x, m):
    return (x + m - 1) // m * m


def _pick_tile(n):
    """Token-tile size: keep >= 2 grid steps when possible (v7x megacore /
    pipeline overlap), sublane-aligned, capped at _MAX_TILE."""
    tn = min(_MAX_TILE, _round_up(max(pl.cdiv(n, 2), 1), 8))
    return max(tn, 8)


# ----------------------------------------------------------------------------
# Kernels
# ----------------------------------------------------------------------------

def _gather_tile(idx_sm, table_ref, logits_ref, *, base, n_valid, tn):
    """Exact embedding-row gather for one (tn, V) logits tile.

    Token ids live in SMEM (scalar prefetch).  Each row is a dynamic
    sublane-indexed copy table[idx[r]] -> logits[r]: no one-hot, no MXU,
    bit-exact vs. the f32 reference.  Ragged last tile: clamp the SMEM index
    so every row written is a real table row (never reads OOB ids).
    """
    def body(r, carry):
        safe = jnp.minimum(base + r, n_valid - 1)
        tok = idx_sm[safe]
        logits_ref[pl.ds(r, 1), :] = table_ref[pl.ds(tok, 1), :]
        return carry

    lax.fori_loop(0, tn, body, 0, unroll=8)


def _embed_kernel(idx_sm, table_ref, logits_ref, *, n_valid, tn):
    """Inference path: embedding gather only (pure copy, DMA-bound)."""
    base = pl.program_id(0) * tn
    _gather_tile(idx_sm, table_ref, logits_ref, base=base, n_valid=n_valid, tn=tn)


def _embed_loss_kernel(idx_sm, tgt_ref, table_ref, logits_ref, nll_ref, *,
                       n_valid, tn):
    """Training path: exact gather + stable log-softmax NLL.

    Per-row NLL partials are accumulated into a grid-resident (tn, 1) output
    block (constant index_map) -> single tiny HBM writeback at the end.
    """
    i = pl.program_id(0)
    base = i * tn

    @pl.when(i == 0)
    def _():
        nll_ref[...] = jnp.zeros_like(nll_ref)

    _gather_tile(idx_sm, table_ref, logits_ref, base=base, n_valid=n_valid, tn=tn)

    logits = logits_ref[...]                                    # (tn, V) f32
    v = logits.shape[-1]
    lane = lax.broadcasted_iota(jnp.int32, (tn, v), 1)

    # Numerically-stable log-softmax + NLL for this tile (all f32).
    m = jnp.max(logits, axis=-1, keepdims=True)
    lse = m + jnp.log(jnp.sum(jnp.exp(logits - m), axis=-1, keepdims=True))
    picked = jnp.sum(jnp.where(lane == tgt_ref[...], logits, 0.0),
                     axis=-1, keepdims=True)
    nll = lse - picked                                          # (tn, 1)

    # Rows beyond the valid range (ragged last tile) contribute 0.
    row = base + lax.broadcasted_iota(jnp.int32, (tn, 1), 0)
    nll_ref[...] += jnp.where(row < n_valid, nll, 0.0)


# ----------------------------------------------------------------------------
# Wrappers
# ----------------------------------------------------------------------------

@jax.jit
def _bigram_logits(idx_flat, table):
    n = idx_flat.shape[0]
    v = table.shape[0]
    tn = _pick_tile(n)
    grid = pl.cdiv(n, tn)

    kernel = functools.partial(_embed_kernel, n_valid=n, tn=tn)

    logits = pl.pallas_call(
        kernel,
        out_shape=jax.ShapeDtypeStruct((n, v), jnp.float32),
        grid_spec=pltpu.PrefetchScalarGridSpec(
            num_scalar_prefetch=1,                                # idx -> SMEM
            grid=(grid,),
            in_specs=[
                pl.BlockSpec(memory_space=pltpu.MemorySpace.VMEM),  # table (resident)
            ],
            out_specs=pl.BlockSpec((tn, v), lambda i, idx_sm: (i, 0)),
        ),
        compiler_params=pltpu.CompilerParams(
            dimension_semantics=("parallel",),
            vmem_limit_bytes=_VMEM_LIMIT,
        ),
        cost_estimate=pl.CostEstimate(
            flops=0,
            transcendentals=0,
            bytes_accessed=n * 4 + v * v * 4 + n * v * 4,
        ),
    )(idx_flat.astype(jnp.int32), table)
    return logits


@jax.jit
def _bigram_logits_and_loss(idx_flat, tgt_flat, table):
    n = idx_flat.shape[0]
    v = table.shape[0]
    tn = _pick_tile(n)
    grid = pl.cdiv(n, tn)

    # Targets stay a narrow (n, 1) int32 operand: it is needed as a per-row
    # vector for the lane-compare pick and is ~V x smaller than the logits
    # traffic, so the narrow DMA is negligible here.
    tgt2d = tgt_flat.astype(jnp.int32).reshape(n, 1)

    kernel = functools.partial(_embed_loss_kernel, n_valid=n, tn=tn)

    logits, nll_acc = pl.pallas_call(
        kernel,
        out_shape=(
            jax.ShapeDtypeStruct((n, v), jnp.float32),
            jax.ShapeDtypeStruct((tn, 1), jnp.float32),
        ),
        grid_spec=pltpu.PrefetchScalarGridSpec(
            num_scalar_prefetch=1,                                # idx -> SMEM
            grid=(grid,),
            in_specs=[
                pl.BlockSpec((tn, 1), lambda i, idx_sm: (i, 0)),    # target
                pl.BlockSpec(memory_space=pltpu.MemorySpace.VMEM),  # table (resident)
            ],
            out_specs=[
                pl.BlockSpec((tn, v), lambda i, idx_sm: (i, 0)),    # logits
                pl.BlockSpec((tn, 1), lambda i, idx_sm: (0, 0)),    # NLL accumulator
            ],
        ),
        compiler_params=pltpu.CompilerParams(
            dimension_semantics=("arbitrary",),   # NLL output is a grid reduction
            vmem_limit_bytes=_VMEM_LIMIT,
        ),
        cost_estimate=pl.CostEstimate(
            flops=6 * n * v,
            transcendentals=n * v,
            bytes_accessed=2 * n * 4 + v * v * 4 + n * v * 4 + tn * 4,
        ),
    )(idx_flat.astype(jnp.int32), tgt2d, table)

    # Mean over valid rows; 1/n folded at trace time (multiply, no divide).
    loss = jnp.sum(nll_acc) * (1.0 / n)
    return logits, loss


class BigramModelPallas:
    """JAX/Pallas port of the PyTorch BigramModel forward pass."""

    def __init__(self, vocab_size, key):
        self.vocab_size = vocab_size
        # nn.Embedding default init ~ N(0, 1); deterministic via PRNGKey.
        self.embedding_table = jax.random.normal(
            key, (vocab_size, vocab_size), dtype=jnp.float32
        )

    def forward(self, idx, target=None):
        b, t = idx.shape
        v = self.vocab_size
        if target is None:
            logits_flat = _bigram_logits(idx.reshape(b * t), self.embedding_table)
            return logits_flat.reshape(b, t, v), None
        logits_flat, loss = _bigram_logits_and_loss(
            idx.reshape(b * t), target.reshape(b * t), self.embedding_table
        )
        # Matches PyTorch: logits returned flattened to (B*T, C) when target given.
        return logits_flat, loss

    # TODO(synk): generate() (autoregressive multinomial sampling loop) is host-side
    # control flow around forward() and is not implemented as a kernel here.


# ----------------------------------------------------------------------------
# Reference + self-check
# ----------------------------------------------------------------------------

def _reference(table, idx, target):
    logits = table[idx]                      # (B, T, V)
    b, t, v = logits.shape
    lf = logits.reshape(b * t, v)
    tf = target.reshape(b * t)
    lse = jax.scipy.special.logsumexp(lf, axis=-1)
    nll = lse - jnp.take_along_axis(lf, tf[:, None], axis=-1)[:, 0]
    return lf, jnp.mean(nll)


if __name__ == "__main__":
    key = jax.random.PRNGKey(0)
    k_tab, k_idx, k_tgt, k_idx2, k_tgt2 = jax.random.split(key, 5)

    VOCAB = 128
    B, T = 2, 8

    model = BigramModelPallas(VOCAB, k_tab)
    idx = jax.random.randint(k_idx, (B, T), 0, VOCAB, dtype=jnp.int32)
    target = jax.random.randint(k_tgt, (B, T), 0, VOCAB, dtype=jnp.int32)

    logits, loss = model.forward(idx, target)
    logits = jax.block_until_ready(logits)
    loss = jax.block_until_ready(loss)

    ref_logits, ref_loss = _reference(model.embedding_table, idx, target)
    assert logits.shape == (B * T, VOCAB)
    assert jnp.allclose(logits, ref_logits, atol=1e-5, rtol=1e-5)
    assert jnp.allclose(loss, ref_loss, atol=1e-5, rtol=1e-5)

    # target=None (inference) path: gather-only kernel, no loss work.
    logits3d, none_loss = model.forward(idx, None)
    jax.block_until_ready(logits3d)
    assert logits3d.shape == (B, T, VOCAB) and none_loss is None
    assert jnp.allclose(logits3d.reshape(B * T, VOCAB), ref_logits, atol=1e-5, rtol=1e-5)

    # Larger, non-tile-aligned case: exercises multi-tile grid, ragged last
    # block (no wrapper padding), and the grid-resident NLL accumulator
    # (N=400 -> tn=200, grid=2).
    B2, T2 = 2, 200
    idx2 = jax.random.randint(k_idx2, (B2, T2), 0, VOCAB, dtype=jnp.int32)
    tgt2 = jax.random.randint(k_tgt2, (B2, T2), 0, VOCAB, dtype=jnp.int32)
    logits2, loss2 = model.forward(idx2, tgt2)
    logits2 = jax.block_until_ready(logits2)
    loss2 = jax.block_until_ready(loss2)
    ref_logits2, ref_loss2 = _reference(model.embedding_table, idx2, tgt2)
    assert jnp.allclose(logits2, ref_logits2, atol=1e-5, rtol=1e-5)
    assert jnp.allclose(loss2, ref_loss2, atol=1e-5, rtol=1e-5)

    print("KERNEL_OK")
</pallas_src>

<mosaic_0001>
module attributes {stable_mosaic.version = 11 : i64} {
  func.func @_embed_loss_kernel(%arg0: i32, %arg1: memref<16xi32, #tpu.memory_space<smem>>, %arg2: memref<8x1xi32, #tpu.memory_space<vmem>>, %arg3: memref<128x128xf32, #tpu.memory_space<vmem>>, %arg4: memref<8x128xf32, #tpu.memory_space<vmem>>, %arg5: memref<8x1xf32, #tpu.memory_space<vmem>>) attributes {dimension_semantics = [#tpu.dimension_semantics<arbitrary>], iteration_bounds = array<i64: 2>, scalar_prefetch = 1 : i64, scratch_operands = 0 : i64, tpu.core_type = #tpu.core_type<tc>, window_params = [{transform_indices = @transform_0, window_bounds = array<i64: 8, 1>}, {pipeline_mode = #tpu.pipeline_mode<synchronous>, transform_indices = @transform_1, window_bounds = array<i64: 128, 128>}, {transform_indices = @transform_2, window_bounds = array<i64: 8, 128>}, {pipeline_mode = #tpu.pipeline_mode<synchronous>, transform_indices = @transform_3, window_bounds = array<i64: 8, 1>}]} {
    %c8_i32 = arith.constant 8 : i32
    %0 = arith.muli %arg0, %c8_i32 : i32
    %c0_i32 = arith.constant 0 : i32
    %1 = arith.cmpi eq, %arg0, %c0_i32 : i32
    %2 = arith.extui %1 : i1 to i32
    %c0_i32_0 = arith.constant 0 : i32
    %3 = arith.cmpi ne, %2, %c0_i32_0 : i32
    scf.if %3 {
      %cst_37 = arith.constant 0.000000e+00 : f32
      %97 = vector.broadcast %cst_37 : f32 to vector<8x1xf32>
      %c0_38 = arith.constant 0 : index
      %c0_39 = arith.constant 0 : index
      %98 = vector.load %arg5[%c0_38, %c0_39] : memref<8x1xf32, #tpu.memory_space<vmem>>, vector<8x1xf32>
      tpu.vector_store %arg5[%c0_38, %c0_39], %97 {strides = array<i32>} : memref<8x1xf32, #tpu.memory_space<vmem>>, vector<8x1xf32>,
    } else {
    }
    %c0_i32_1 = arith.constant 0 : i32
    %4 = arith.addi %0, %c0_i32_1 : i32
    %c15_i32 = arith.constant 15 : i32
    %5 = arith.minsi %4, %c15_i32 : i32
    %6 = arith.index_cast %5 : i32 to index
    %7 = memref.load %arg1[%6] : memref<16xi32, #tpu.memory_space<smem>>
    %8 = arith.index_cast %7 : i32 to index
    %c0 = arith.constant 0 : index
    %9 = vector.load %arg3[%8, %c0] : memref<128x128xf32, #tpu.memory_space<vmem>>, vector<1x128xf32>
    %10 = arith.index_cast %c0_i32_1 : i32 to index
    %c0_2 = arith.constant 0 : index
    %11 = vector.load %arg4[%10, %c0_2] : memref<8x128xf32, #tpu.memory_space<vmem>>, vector<1x128xf32>
    tpu.vector_store %arg4[%10, %c0_2], %9 {strides = array<i32>} : memref<8x128xf32, #tpu.memory_space<vmem>>, vector<1x128xf32>,
    %c1_i32 = arith.constant 1 : i32
    %12 = arith.addi %0, %c1_i32 : i32
    %c15_i32_3 = arith.constant 15 : i32
    %13 = arith.minsi %12, %c15_i32_3 : i32
    %14 = arith.index_cast %13 : i32 to index
    %15 = memref.load %arg1[%14] : memref<16xi32, #tpu.memory_space<smem>>
    %16 = arith.index_cast %15 : i32 to index
    %c0_4 = arith.constant 0 : index
    %17 = vector.load %arg3[%16, %c0_4] : memref<128x128xf32, #tpu.memory_space<vmem>>, vector<1x128xf32>
    %18 = arith.index_cast %c1_i32 : i32 to index
    %c0_5 = arith.constant 0 : index
    %19 = vector.load %arg4[%18, %c0_5] : memref<8x128xf32, #tpu.memory_space<vmem>>, vector<1x128xf32>
    tpu.vector_store %arg4[%18, %c0_5], %17 {strides = array<i32>} : memref<8x128xf32, #tpu.memory_space<vmem>>, vector<1x128xf32>,
    %c2_i32 = arith.constant 2 : i32
    %20 = arith.addi %0, %c2_i32 : i32
    %c15_i32_6 = arith.constant 15 : i32
    %21 = arith.minsi %20, %c15_i32_6 : i32
    %22 = arith.index_cast %21 : i32 to index
    %23 = memref.load %arg1[%22] : memref<16xi32, #tpu.memory_space<smem>>
    %24 = arith.index_cast %23 : i32 to index
    %c0_7 = arith.constant 0 : index
    %25 = vector.load %arg3[%24, %c0_7] : memref<128x128xf32, #tpu.memory_space<vmem>>, vector<1x128xf32>
    %26 = arith.index_cast %c2_i32 : i32 to index
    %c0_8 = arith.constant 0 : index
    %27 = vector.load %arg4[%26, %c0_8] : memref<8x128xf32, #tpu.memory_space<vmem>>, vector<1x128xf32>
    tpu.vector_store %arg4[%26, %c0_8], %25 {strides = array<i32>} : memref<8x128xf32, #tpu.memory_space<vmem>>, vector<1x128xf32>,
    %c3_i32 = arith.constant 3 : i32
    %28 = arith.addi %0, %c3_i32 : i32
    %c15_i32_9 = arith.constant 15 : i32
    %29 = arith.minsi %28, %c15_i32_9 : i32
    %30 = arith.index_cast %29 : i32 to index
    %31 = memref.load %arg1[%30] : memref<16xi32, #tpu.memory_space<smem>>
    %32 = arith.index_cast %31 : i32 to index
    %c0_10 = arith.constant 0 : index
    %33 = vector.load %arg3[%32, %c0_10] : memref<128x128xf32, #tpu.memory_space<vmem>>, vector<1x128xf32>
    %34 = arith.index_cast %c3_i32 : i32 to index
    %c0_11 = arith.constant 0 : index
    %35 = vector.load %arg4[%34, %c0_11] : memref<8x128xf32, #tpu.memory_space<vmem>>, vector<1x128xf32>
    tpu.vector_store %arg4[%34, %c0_11], %33 {strides = array<i32>} : memref<8x128xf32, #tpu.memory_space<vmem>>, vector<1x128xf32>,
    %c4_i32 = arith.constant 4 : i32
    %36 = arith.addi %0, %c4_i32 : i32
    %c15_i32_12 = arith.constant 15 : i32
    %37 = arith.minsi %36, %c15_i32_12 : i32
    %38 = arith.index_cast %37 : i32 to index
    %39 = memref.load %arg1[%38] : memref<16xi32, #tpu.memory_space<smem>>
    %40 = arith.index_cast %39 : i32 to index
    %c0_13 = arith.constant 0 : index
    %41 = vector.load %arg3[%40, %c0_13] : memref<128x128xf32, #tpu.memory_space<vmem>>, vector<1x128xf32>
    %42 = arith.index_cast %c4_i32 : i32 to index
    %c0_14 = arith.constant 0 : index
    %43 = vector.load %arg4[%42, %c0_14] : memref<8x128xf32, #tpu.memory_space<vmem>>, vector<1x128xf32>
    tpu.vector_store %arg4[%42, %c0_14], %41 {strides = array<i32>} : memref<8x128xf32, #tpu.memory_space<vmem>>, vector<1x128xf32>,
    %c5_i32 = arith.constant 5 : i32
    %44 = arith.addi %0, %c5_i32 : i32
    %c15_i32_15 = arith.constant 15 : i32
    %45 = arith.minsi %44, %c15_i32_15 : i32
    %46 = arith.index_cast %45 : i32 to index
    %47 = memref.load %arg1[%46] : memref<16xi32, #tpu.memory_space<smem>>
    %48 = arith.index_cast %47 : i32 to index
    %c0_16 = arith.constant 0 : index
    %49 = vector.load %arg3[%48, %c0_16] : memref<128x128xf32, #tpu.memory_space<vmem>>, vector<1x128xf32>
    %50 = arith.index_cast %c5_i32 : i32 to index
    %c0_17 = arith.constant 0 : index
    %51 = vector.load %arg4[%50, %c0_17] : memref<8x128xf32, #tpu.memory_space<vmem>>, vector<1x128xf32>
    tpu.vector_store %arg4[%50, %c0_17], %49 {strides = array<i32>} : memref<8x128xf32, #tpu.memory_space<vmem>>, vector<1x128xf32>,
    %c6_i32 = arith.constant 6 : i32
    %52 = arith.addi %0, %c6_i32 : i32
    %c15_i32_18 = arith.constant 15 : i32
    %53 = arith.minsi %52, %c15_i32_18 : i32
    %54 = arith.index_cast %53 : i32 to index
    %55 = memref.load %arg1[%54] : memref<16xi32, #tpu.memory_space<smem>>
    %56 = arith.index_cast %55 : i32 to index
    %c0_19 = arith.constant 0 : index
    %57 = vector.load %arg3[%56, %c0_19] : memref<128x128xf32, #tpu.memory_space<vmem>>, vector<1x128xf32>
    %58 = arith.index_cast %c6_i32 : i32 to index
    %c0_20 = arith.constant 0 : index
    %59 = vector.load %arg4[%58, %c0_20] : memref<8x128xf32, #tpu.memory_space<vmem>>, vector<1x128xf32>
    tpu.vector_store %arg4[%58, %c0_20], %57 {strides = array<i32>} : memref<8x128xf32, #tpu.memory_space<vmem>>, vector<1x128xf32>,
    %c7_i32 = arith.constant 7 : i32
    %60 = arith.addi %0, %c7_i32 : i32
    %c15_i32_21 = arith.constant 15 : i32
    %61 = arith.minsi %60, %c15_i32_21 : i32
    %62 = arith.index_cast %61 : i32 to index
    %63 = memref.load %arg1[%62] : memref<16xi32, #tpu.memory_space<smem>>
    %64 = arith.index_cast %63 : i32 to index
    %c0_22 = arith.constant 0 : index
    %65 = vector.load %arg3[%64, %c0_22] : memref<128x128xf32, #tpu.memory_space<vmem>>, vector<1x128xf32>
    %66 = arith.index_cast %c7_i32 : i32 to index
    %c0_23 = arith.constant 0 : index
    %67 = vector.load %arg4[%66, %c0_23] : memref<8x128xf32, #tpu.memory_space<vmem>>, vector<1x128xf32>
    tpu.vector_store %arg4[%66, %c0_23], %65 {strides = array<i32>} : memref<8x128xf32, #tpu.memory_space<vmem>>, vector<1x128xf32>,
    %c8_i32_24 = arith.constant 8 : i32
    %c0_25 = arith.constant 0 : index
    %c0_26 = arith.constant 0 : index
    %68 = vector.load %arg4[%c0_25, %c0_26] : memref<8x128xf32, #tpu.memory_space<vmem>>, vector<8x128xf32>
    %69 = tpu.iota {dimensions = array<i32: 1>} : vector<8x128xi32>
    %cst = arith.constant dense<0xFF800000> : vector<8xf32>
    %70 = vector.multi_reduction <maximumf>, %68, %cst [1] : vector<8x128xf32> to vector<8xf32>
    %71 = vector.shape_cast %70 : vector<8xf32> to vector<8x1xf32>
    %72 = vector.broadcast %71 : vector<8x1xf32> to vector<8x128xf32>
    %73 = arith.subf %68, %72 : vector<8x128xf32>
    %74 = math.exp %73 : vector<8x128xf32>
    %cst_27 = arith.constant dense<0.000000e+00> : vector<8xf32>
    %75 = vector.multi_reduction <add>, %74, %cst_27 [1] : vector<8x128xf32> to vector<8xf32>
    %76 = vector.shape_cast %75 : vector<8xf32> to vector<8x1xf32>
    %77 = math.log %76 : vector<8x1xf32>
    %78 = arith.addf %71, %77 : vector<8x1xf32>
    %c0_28 = arith.constant 0 : index
    %c0_29 = arith.constant 0 : index
    %79 = vector.load %arg2[%c0_28, %c0_29] : memref<8x1xi32, #tpu.memory_space<vmem>>, vector<8x1xi32>
    %80 = vector.broadcast %79 : vector<8x1xi32> to vector<8x128xi32>
    %81 = arith.cmpi eq, %69, %80 : vector<8x128xi32>
    %cst_30 = arith.constant 0.000000e+00 : f32
    %82 = vector.broadcast %cst_30 : f32 to vector<8x128xf32>
    %83 = arith.select %81, %68, %82 : vector<8x128xi1>, vector<8x128xf32>
    %cst_31 = arith.constant dense<0.000000e+00> : vector<8xf32>
    %84 = vector.multi_reduction <add>, %83, %cst_31 [1] : vector<8x128xf32> to vector<8xf32>
    %85 = vector.shape_cast %84 : vector<8xf32> to vector<8x1xf32>
    %86 = arith.subf %78, %85 : vector<8x1xf32>
    %87 = tpu.iota {dimensions = array<i32: 0>} : vector<8x1xi32>
    %88 = vector.broadcast %0 : i32 to vector<8x1xi32>
    %89 = arith.addi %88, %87 : vector<8x1xi32>
    %c0_32 = arith.constant 0 : index
    %c0_33 = arith.constant 0 : index
    %90 = vector.load %arg5[%c0_32, %c0_33] : memref<8x1xf32, #tpu.memory_space<vmem>>, vector<8x1xf32>
    %c16_i32 = arith.constant 16 : i32
    %91 = vector.broadcast %c16_i32 : i32 to vector<8x1xi32>
    %92 = arith.cmpi slt, %89, %91 : vector<8x1xi32>
    %cst_34 = arith.constant 0.000000e+00 : f32
    %93 = vector.broadcast %cst_34 : f32 to vector<8x1xf32>
    %94 = arith.select %92, %86, %93 : vector<8x1xi1>, vector<8x1xf32>
    %95 = arith.addf %90, %94 : vector<8x1xf32>
    %c0_35 = arith.constant 0 : index
    %c0_36 = arith.constant 0 : index
    %96 = vector.load %arg5[%c0_35, %c0_36] : memref<8x1xf32, #tpu.memory_space<vmem>>, vector<8x1xf32>
    tpu.vector_store %arg5[%c0_35, %c0_36], %95 {strides = array<i32>} : memref<8x1xf32, #tpu.memory_space<vmem>>, vector<8x1xf32>,
    return
  }
  func.func @transform_0(%arg0: i32, %arg1: memref<16xi32, #tpu.memory_space<smem>>) -> (i32, i32) {
    %c0_i32 = arith.constant 0 : i32
    %c0_i32_0 = arith.constant 0 : i32
    return %arg0, %c0_i32 : i32, i32
  }
  func.func @transform_1(%arg0: i32, %arg1: memref<16xi32, #tpu.memory_space<smem>>) -> (i32, i32) {
    %c0_i32 = arith.constant 0 : i32
    %c0_i32_0 = arith.constant 0 : i32
    %c0_i32_1 = arith.constant 0 : i32
    return %c0_i32, %c0_i32_0 : i32, i32
  }
  func.func @transform_2(%arg0: i32, %arg1: memref<16xi32, #tpu.memory_space<smem>>) -> (i32, i32) {
    %c0_i32 = arith.constant 0 : i32
    %c0_i32_0 = arith.constant 0 : i32
    return %arg0, %c0_i32 : i32, i32
  }
  func.func @transform_3(%arg0: i32, %arg1: memref<16xi32, #tpu.memory_space<smem>>) -> (i32, i32) {
    %c0_i32 = arith.constant 0 : i32
    %c0_i32_0 = arith.constant 0 : i32
    %c0_i32_1 = arith.constant 0 : i32
    return %c0_i32, %c0_i32_0 : i32, i32
  }
}

</mosaic_0001>

<llo_original>
// kernel: _bigram_logits_and_loss.1
$region0: #{_bigram_logits_and_loss.1}
  #allocation0 [shape = 'u32[]', space=smem, size = 0x4, offset = 0x4, fixed_abs, tag = 'smem constant byte address 0x4 - core index']
  #allocation1 [shape = 'u32[144,128]{1,0:T(1,128)}', space=vmem, size = 0x12000, scoped, tag = 'internal scratch']
  #allocation2 [shape = 's32[1]{0}', space=sflag, size = 0x4, scoped, tag = 'scoped memory for _bigram_logits_and_loss.1']
  #allocation3 [shape = 'u8[512]{0}', space=smem, size = 0x200, scoped, tag = 'prefetched SMEM operand 0']
  %s0 = inlined_call_operand.vmem [shape: s32[16], index: 0, kind: input, shape index: {}]
  %s1 = inlined_call_operand.vmem [shape: s32[16,1], index: 1, kind: input, shape index: {}]
  %s2 = inlined_call_operand.hbm [shape: f32[128,128], index: 2, kind: input, shape index: {}]
  %s3 = inlined_call_operand.hbm [shape: f32[16,128], index: 3, kind: output, shape index: {0}]
  %s4 = inlined_call_operand.vmem [shape: f32[8,1], index: 4, kind: output, shape index: {1}]
  %5 = xla_tuple %s3, %s4
  %s6 = sld [smem:[#allocation0]]
  $region57: #{_bigram_logits_and_loss.1} parent=0
    _
  %s8 = ssub.s32 1, %s6
  %s9 = scalar_select 0, %s8, %s6
  %s10 = sshll.u32 %s0, 4
  %s11 = int_to_ptr.vmem [resolvable:$true] %s10
  %13 = dma.vmem_to_smem %s11, 16, [#allocation3], [#allocation2]
  %14 = dma.done [#allocation2], 16
  %15 = sfence
  $region1: #{_bigram_logits_and_loss.1} parent=0
    #allocation4 [shape = 'u8[65536]{0}', space=vmem, size = 0x10000, scoped, tag = 'input window, operand 2, single buffered']
    #allocation5 [shape = 's32[2]{0}', space=sflag, size = 0x8, scoped, tag = 'scoped memory for _bigram_logits_and_loss.1']
    #allocation6 [shape = 's32[2]{0}', space=sflag, size = 0x8, scoped, tag = 'scoped memory for _bigram_logits_and_loss.1']
    #allocation7 [shape = 'u8[8192]{0}', space=vmem, size = 0x2000, scoped, tag = 'output window, operand 0']
    %16 = vsyncpa [#allocation5], 0
    %17 = vsyncpa [#allocation6], 0
    %s18 = scalar_lea.sflag [#allocation6], 1
    %19 = vsyncpa %s18, 0
    loop: start=0, step=1, limit=4
    $region2: #{_bigram_logits_and_loss.1} parent=1 // loop_pre_header
      _
    $region3: #{_bigram_logits_and_loss.1} parent=1 // loop_header
      %s21 = sphi 0, %s25
      %p22 = scmp.ge.s32.totalorder %s21, 4
      %s31 = sphi 0, %s33
      %s34 = sphi 0, %s31
      %s35 = sphi 0, %s34
      %s51 = sphi 0, %s35
      %s55 = sphi 0, %s55
      %s57 = sphi 0, %s55
      %s58 = sphi 0, %s57
      %s72 = sphi 0, %s58
      %s78 = sphi 0, %s80
      %s81 = sphi 0, %s78
      %s82 = sphi 0, %s81
      %s98 = sphi 0, %s82
      %s102 = sphi 0, %s102
      %s104 = sphi 0, %s102
      %s105 = sphi 0, %s104
      %s119 = sphi 0, %s105
    $region4: #{_bigram_logits_and_loss.1} parent=1 // loop_header_branch
      %24 = sbr.rel (%p22) target = $region8
    $region5: #{_bigram_logits_and_loss.1} parent=1 // loop_body
      %s26 = ssub.s32 %s21, 1
      %s27 = ssub.s32 %s21, 2
      %s28 = sadd.s32 %s21, 1
      %s29 = ssub.s32 %s21, %s28
      %p30 = scmp.eq.s32.totalorder %s29, 0
      %s32 = sadd.s32 %s31, 1
      %s33 = scalar_select %p30, %s31, %s32
      %p36 = pneg %p30
      %p37 = scmp.eq.s32.totalorder %s21, 1
      %p38 = por %p36, %p37
      %p39 = scmp.ne.s32.totalorder %s31, %s34
      %p40 = scmp.eq.s32.totalorder %s21, 0
      %p41 = por %p39, %p40
      %p42 = scmp.ne.s32.totalorder %s31, %s34
      %p43 = scmp.eq.s32.totalorder %s26, 1
      %p44 = por %p42, %p43
      %p45 = scmp.ne.s32.totalorder %s34, %s35
      %p46 = scmp.eq.s32.totalorder %s26, 0
      %p47 = por %p45, %p46
      %p48 = scmp.ne.s32.totalorder %s34, %s35
      %p49 = scmp.eq.s32.totalorder %s27, 1
      %p50 = por %p48, %p49
      %p52 = scmp.ne.s32.totalorder %s35, %s51
      %p53 = scmp.eq.s32.totalorder %s27, 0
      %p54 = por %p52, %p53
      %s56 = sadd.s32 %s55, 1
      %p59 = scmp.eq.s32.totalorder %s21, 1
      %p60 = scmp.ne.s32.totalorder %s55, %s57
      %p61 = scmp.eq.s32.totalorder %s21, 0
      %p62 = por %p60, %p61
      %p63 = scmp.ne.s32.totalorder %s55, %s57
      %p64 = scmp.eq.s32.totalorder %s26, 1
      %p65 = por %p63, %p64
      %p66 = scmp.ne.s32.totalorder %s57, %s58
      %p67 = scmp.eq.s32.totalorder %s26, 0
      %p68 = por %p66, %p67
      %p69 = scmp.ne.s32.totalorder %s57, %s58
      %p70 = scmp.eq.s32.totalorder %s27, 1
      %p71 = por %p69, %p70
      %p73 = scmp.ne.s32.totalorder %s58, %s72
      %p74 = scmp.eq.s32.totalorder %s27, 0
      %p75 = por %p73, %p74
      %s76 = ssub.s32 %s21, %s28
      %p77 = scmp.eq.s32.totalorder %s76, 0
      %s79 = sadd.s32 %s78, 1
      %s80 = scalar_select %p77, %s78, %s79
      %p83 = pneg %p77
      %p84 = scmp.eq.s32.totalorder %s21, 1
      %p85 = por %p83, %p84
      %p86 = scmp.ne.s32.totalorder %s78, %s81
      %p87 = scmp.eq.s32.totalorder %s21, 0
      %p88 = por %p86, %p87
      %p89 = scmp.ne.s32.totalorder %s78, %s81
      %p90 = scmp.eq.s32.totalorder %s26, 1
      %p91 = por %p89, %p90
      %p92 = scmp.ne.s32.totalorder %s81, %s82
      %p93 = scmp.eq.s32.totalorder %s26, 0
      %p94 = por %p92, %p93
      %p95 = scmp.ne.s32.totalorder %s81, %s82
      %p96 = scmp.eq.s32.totalorder %s27, 1
      %p97 = por %p95, %p96
      %p99 = scmp.ne.s32.totalorder %s82, %s98
      %p100 = scmp.eq.s32.totalorder %s27, 0
      %p101 = por %p99, %p100
      %s103 = sadd.s32 %s102, 1
      %p106 = scmp.eq.s32.totalorder %s21, 1
      %p107 = scmp.ne.s32.totalorder %s102, %s104
      %p108 = scmp.eq.s32.totalorder %s21, 0
      %p109 = por %p107, %p108
      %p110 = scmp.ne.s32.totalorder %s102, %s104
      %p111 = scmp.eq.s32.totalorder %s26, 1
      %p112 = por %p110, %p111
      %p113 = scmp.ne.s32.totalorder %s104, %s105
      %p114 = scmp.eq.s32.totalorder %s26, 0
      %p115 = por %p113, %p114
      %p116 = scmp.ne.s32.totalorder %s104, %s105
      %p117 = scmp.eq.s32.totalorder %s27, 1
      %p118 = por %p116, %p117
      %p120 = scmp.ne.s32.totalorder %s105, %s119
      %p121 = scmp.eq.s32.totalorder %s27, 0
      %p122 = por %p120, %p121
      %p123 = scmp.le.s32.totalorder 1, %s21
      %p124 = scmp.lt.s32.totalorder %s21, 3
      %p125 = pnand %p123, %p124
      %p126 = pneg %p125
      // Predicated region
      $region9: #{_bigram_logits_and_loss.1} parent=5 // pred_check
        _
      $region10: #{_bigram_logits_and_loss.1} parent=5 // pred_check_branch
        %128 = sbr.rel (%p125) target = $region12
      $region11: #{_bigram_logits_and_loss.1} parent=5 // pred_region
        %s129 = ssub.s32 %s21, 1
        // Predicated region
        $region13: #{_bigram_logits_and_loss.1} parent=11 // pred_check
          %p130 = pneg %p68
        $region14: #{_bigram_logits_and_loss.1} parent=11 // pred_check_branch
          %132 = sbr.rel (%p130) target = $region16
        $region15: #{_bigram_logits_and_loss.1} parent=11 // pred_region
          %s134 = ssub.s32 2048, 2048
          %135 = vsyncadd [#allocation5], %s134
          %s136 = sshll.u32 [#allocation4], 4
          %s137 = int_to_ptr.vmem [resolvable:$true] %s136
          %142 = dma.hbm_to_vmem [thread:$0]  %s2, 2048, %s137, [#allocation5], 128, 128, 8
        $region16: #{_bigram_logits_and_loss.1} parent=11 // pred_fallthru
          _
      $region12: #{_bigram_logits_and_loss.1} parent=5 // pred_fallthru
        _
      %p143 = scmp.lt.s32.totalorder %s21, 2
      // Predicated region
      $region17: #{_bigram_logits_and_loss.1} parent=5 // pred_check
        %p144 = pneg %p143
      $region18: #{_bigram_logits_and_loss.1} parent=5 // pred_check_branch
        %146 = sbr.rel (%p144) target = $region20
      $region19: #{_bigram_logits_and_loss.1} parent=5 // pred_region
        // Predicated region
        $region21: #{_bigram_logits_and_loss.1} parent=19 // pred_check
          %p147 = pneg %p41
        $region22: #{_bigram_logits_and_loss.1} parent=19 // pred_check_branch
          %149 = sbr.rel (%p147) target = $region24
        $region23: #{_bigram_logits_and_loss.1} parent=19 // pred_region
          %p150 = scmp.lt.s32.totalorder %s21, 1
          %s151 = scalar_select %p150, %s21, 1
          %s152 = smul.addr %s151, 8
          %s153 = scalar_lea.vmem %s1, %s152
        $region24: #{_bigram_logits_and_loss.1} parent=19 // pred_fallthru
          _
      $region20: #{_bigram_logits_and_loss.1} parent=5 // pred_fallthru
        _
      %p154 = scmp.le.s32.totalorder 1, %s21
      %p155 = scmp.lt.s32.totalorder %s21, 3
      %p156 = pnand %p154, %p155
      %p157 = pneg %p156
      // Predicated region
      $region25: #{_bigram_logits_and_loss.1} parent=5 // pred_check
        _
      $region26: #{_bigram_logits_and_loss.1} parent=5 // pred_check_branch
        %159 = sbr.rel (%p156) target = $region28
      $region27: #{_bigram_logits_and_loss.1} parent=5 // pred_region
        %s160 = ssub.s32 %s21, 1
        // Predicated region
        $region29: #{_bigram_logits_and_loss.1} parent=27 // pred_check
          %p161 = pneg %p68
        $region30: #{_bigram_logits_and_loss.1} parent=27 // pred_check_branch
          %163 = sbr.rel (%p161) target = $region32
        $region31: #{_bigram_logits_and_loss.1} parent=27 // pred_region
          %164 = dma.done [#allocation5], 2048
        $region32: #{_bigram_logits_and_loss.1} parent=27 // pred_fallthru
          _
        %p165 = scmp.lt.s32.totalorder %s26, 1
        %s166 = scalar_select %p165, %s26, 1
        %s167 = smul.addr %s166, 8
        %s168 = scalar_lea.vmem %s1, %s167
        %p169 = pneg %p47
        %p170 = pneg %p44
        %p171 = pneg %p68
        %p172 = pneg %p65
        %p173 = pneg %p94
        %p174 = pneg %p91
        %s175 = sand.u32 %s81, 1
        %s176 = scalar_lea.sflag [#allocation6], %s175
        %s177 = sand.u32 %s81, 1
        %s178 = smul.addr %s177, 8
        %s179 = scalar_lea.vmem [#allocation7], %s178
        %p180 = pneg %p115
        %p181 = pneg %p112
        %p182 = scmp.lt.s32.totalorder %s26, 1
        %s183 = scalar_select %p182, %s26, 1
        %s184 = smul.addr %s183, 8
        %s185 = scalar_lea.vmem %s1, %s184
        %s186 = smul.u32 %s26, 8
        %p187 = scmp.eq.s32.totalorder %s26, 0
        // Predicated region
        $region33: #{_bigram_logits_and_loss.1} parent=27 // pred_check
          %p188 = pneg %p187
        $region34: #{_bigram_logits_and_loss.1} parent=27 // pred_check_branch
          %190 = sbr.rel (%p188) target = $region36
        $region35: #{_bigram_logits_and_loss.1} parent=27 // pred_region
          %vm191 = vcmask 7168
          %192 = vst.msk [vmem:[%s4] sm:$0xff] %vm191, 0.0
        $region36: #{_bigram_logits_and_loss.1} parent=27 // pred_fallthru
          _
        %p193 = scmp.lt.s32.totalorder %s186, 15
        %s194 = scalar_select %p193, %s186, 15
        %s195 = sld [smem:[#allocation3 + %s194]]
        %s196 = scalar_lea.vmem [#allocation4], %s195
        %v197 = vld [vmem:[%s196] sm:$0x1]
        %198 = vst [vmem:[%s179] sm:$0x1] %v197
        %s199 = sadd.s32 %s186, 1
        %p200 = scmp.lt.s32.totalorder %s199, 15
        %s201 = scalar_select %p200, %s199, 15
        %s202 = sld [smem:[#allocation3 + %s201]]
        %s203 = scalar_lea.vmem [#allocation4], %s202
        %v204 = vld [vmem:[%s203] sm:$0x1]
        %205 = vst [vmem:[%s179 + $0x1] sm:$0x1] %v204
        %s206 = sadd.s32 %s186, 2
        %p207 = scmp.lt.s32.totalorder %s206, 15
        %s208 = scalar_select %p207, %s206, 15
        %s209 = sld [smem:[#allocation3 + %s208]]
        %s210 = scalar_lea.vmem [#allocation4], %s209
        %v211 = vld [vmem:[%s210] sm:$0x1]
        %212 = vst [vmem:[%s179 + $0x2] sm:$0x1] %v211
        %s213 = sadd.s32 %s186, 3
        %p214 = scmp.lt.s32.totalorder %s213, 15
        %s215 = scalar_select %p214, %s213, 15
        %s216 = sld [smem:[#allocation3 + %s215]]
        %s217 = scalar_lea.vmem [#allocation4], %s216
        %v218 = vld [vmem:[%s217] sm:$0x1]
        %219 = vst [vmem:[%s179 + $0x3] sm:$0x1] %v218
        %s220 = sadd.s32 %s186, 4
        %p221 = scmp.lt.s32.totalorder %s220, 15
        %s222 = scalar_select %p221, %s220, 15
        %s223 = sld [smem:[#allocation3 + %s222]]
        %s224 = scalar_lea.vmem [#allocation4], %s223
        %v225 = vld [vmem:[%s224] sm:$0x1]
        %226 = vst [vmem:[%s179 + $0x4] sm:$0x1] %v225
        %s227 = sadd.s32 %s186, 5
        %p228 = scmp.lt.s32.totalorder %s227, 15
        %s229 = scalar_select %p228, %s227, 15
        %s230 = sld [smem:[#allocation3 + %s229]]
        %s231 = scalar_lea.vmem [#allocation4], %s230
        %v232 = vld [vmem:[%s231] sm:$0x1]
        %233 = vst [vmem:[%s179 + $0x5] sm:$0x1] %v232
        %s234 = sadd.s32 %s186, 6
        %p235 = scmp.lt.s32.totalorder %s234, 15
        %s236 = scalar_select %p235, %s234, 15
        %s237 = sld [smem:[#allocation3 + %s236]]
        %s238 = scalar_lea.vmem [#allocation4], %s237
        %v239 = vld [vmem:[%s238] sm:$0x1]
        %240 = vst [vmem:[%s179 + $0x6] sm:$0x1] %v239
        %s241 = sadd.s32 %s186, 7
        %p242 = scmp.lt.s32.totalorder %s241, 15
        %s243 = scalar_select %p242, %s241, 15
        %s244 = sld [smem:[#allocation3 + %s243]]
        %s245 = scalar_lea.vmem [#allocation4], %s244
        %v246 = vld [vmem:[%s245] sm:$0x1]
        %247 = vst [vmem:[%s179 + $0x7] sm:$0x1] %v246
        %v248 = vld [vmem:[%s179] sm:$0xff]
        %v249 = vlaneseq
        %v250 = vand.u32 %v249, 127
        %251 = vmax.xlane.f32.xlu0 %v248
        %v252 = vpop.xlane.xlu0 %251
        %v253 = vsub.f32 %v248, %v252
        %v254 = vmul.f32 %v253, 1.442695
        %v255 = vpow.pop %v254
        %256 = vadd.xlane.f32.xlu0 %v255
        %v257 = vpop.xlane.xlu0 %256
        %v258 = vlog2.pop %v257
        %v259 = vmul.f32 %v258, 0.6931472
        %v260 = vadd.f32 %v252, %v259
        %v261 = vld [vmem:[%s185] sm:$0xff]
        %262 = vset.pattern.permute.xlu0 0
        %263 = vperm.xlu0 %262, %v261
        %v264 = vpop.permute.xlu0 %263
        %vm265 = vcmp.eq.s32.totalorder %v250, %v264
        %v266 = vsel %vm265, %v248, 0.0
        %267 = vadd.xlane.f32.xlu0 %v266
        %v268 = vpop.xlane.xlu0 %267
        %v269 = vsub.f32 %v260, %v268
        %v270 = vlaneseq
        %v271 = vshrl.u32 %v270, 7
        %v272 = vstv %s186
        %v273 = vadd.s32 %v272, %v271
        %v274 = vld [vmem:[%s4] sm:$0xff]
        %vm275 = vcmp.lt.s32.totalorder %v273, 16
        %v276 = vsel %vm275, %v269, 0.0
        %v277 = vadd.f32 %v274, %v276
        %vm278 = vcmask 7168
        %279 = vst.msk [vmem:[%s4] sm:$0xff] %vm278, %v277
        %s280 = sand.u32 %s81, 1
        %s281 = scalar_lea.sflag [#allocation6], %s280
        %s282 = sand.u32 %s81, 1
        %s283 = smul.addr %s282, 8
        %s284 = scalar_lea.vmem [#allocation7], %s283
        // Predicated region
        $region37: #{_bigram_logits_and_loss.1} parent=27 // pred_check
          %p285 = pneg %p91
        $region38: #{_bigram_logits_and_loss.1} parent=27 // pred_check_branch
          %287 = sbr.rel (%p285) target = $region40
        $region39: #{_bigram_logits_and_loss.1} parent=27 // pred_region
          %s289 = ssub.s32 128, 128
          %290 = vsyncadd %s281, %s289
          %s291 = smul.addr %s26, 128
          %s292 = scalar_lea.hbm %s3, %s291
          %s294 = sshll.u32 %s284, 4
          %s295 = int_to_ptr.vmem [resolvable:$true] %s294
          %297 = dma.vmem_to_hbm [thread:$0]  %s295, 128, %s292, %s281
        $region40: #{_bigram_logits_and_loss.1} parent=27 // pred_fallthru
          _
        // Predicated region
        $region41: #{_bigram_logits_and_loss.1} parent=27 // pred_check
          %p298 = pneg %p112
        $region42: #{_bigram_logits_and_loss.1} parent=27 // pred_check_branch
          %300 = sbr.rel (%p298) target = $region44
        $region43: #{_bigram_logits_and_loss.1} parent=27 // pred_region
          _
        $region44: #{_bigram_logits_and_loss.1} parent=27 // pred_fallthru
          _
        // Predicated region
        $region45: #{_bigram_logits_and_loss.1} parent=27 // pred_check
          %p301 = pneg %p112
        $region46: #{_bigram_logits_and_loss.1} parent=27 // pred_check_branch
          %303 = sbr.rel (%p301) target = $region48
        $region47: #{_bigram_logits_and_loss.1} parent=27 // pred_region
          _
        $region48: #{_bigram_logits_and_loss.1} parent=27 // pred_fallthru
          _
      $region28: #{_bigram_logits_and_loss.1} parent=5 // pred_fallthru
        _
      %p304 = scmp.le.s32.totalorder 2, %s21
      // Predicated region
      $region49: #{_bigram_logits_and_loss.1} parent=5 // pred_check
        %p305 = pneg %p304
      $region50: #{_bigram_logits_and_loss.1} parent=5 // pred_check_branch
        %307 = sbr.rel (%p305) target = $region52
      $region51: #{_bigram_logits_and_loss.1} parent=5 // pred_region
        %s308 = ssub.s32 %s21, 2
        // Predicated region
        $region53: #{_bigram_logits_and_loss.1} parent=51 // pred_check
          %p309 = pneg %p97
        $region54: #{_bigram_logits_and_loss.1} parent=51 // pred_check_branch
          %311 = sbr.rel (%p309) target = $region56
        $region55: #{_bigram_logits_and_loss.1} parent=51 // pred_region
          %s312 = sand.u32 %s82, 1
          %s313 = scalar_lea.sflag [#allocation6], %s312
          %s314 = sand.u32 %s82, 1
          %s315 = smul.addr %s314, 8
          %s316 = scalar_lea.vmem [#allocation7], %s315
          %317 = dma.done %s313, 128
        $region56: #{_bigram_logits_and_loss.1} parent=51 // pred_fallthru
          _
      $region52: #{_bigram_logits_and_loss.1} parent=5 // pred_fallthru
        _
    $region6: #{_bigram_logits_and_loss.1} parent=1 // loop_footer
      %s25 = sadd.s32 1, %s21
    $region7: #{_bigram_logits_and_loss.1} parent=1 // loop_footer_branch
      %20 = sbr.rel target = $region3
    $region8: #{_bigram_logits_and_loss.1} parent=1 // loop_exit
      _
    %318 = vsyncpa [#allocation5], 1
    %s319 = scalar_lea.sflag [#allocation5], 1
    %320 = vsyncpa %s319, 1
    %321 = vsyncpa [#allocation6], 1
    %s322 = scalar_lea.sflag [#allocation6], 1
    %323 = vsyncpa %s322, 1

</llo_original>
